<compile_context>
chip_gen: v7x
topology: tpu7x:2x2x1
jax: 0.10.0
libtpu: 0.0.40
codegen_flags: <defaults>
</compile_context>

<pallas_src>
import functools

import jax
import jax.numpy as jnp
from jax import lax
from jax.experimental import pallas as pl
from jax.experimental.pallas import tpu as pltpu


def _round_up(x: int, m: int) -> int:
    return ((x + m - 1) // m) * m


def _round_down(x: int, m: int) -> int:
    return (x // m) * m


# --------------------------------- kernel ------------------------------------
def _enhance_kernel(x_ref, w_ref, o_ref, acc_ref, *, cast_bf16: bool):
    """One (tm, tn) output tile of o = x @ w.T, accumulated over the K grid axis.

    x_ref   : (tm, tk)  activations
    w_ref   : (tn, tk)  nn.Linear weight tile in its native (out, in) layout
    o_ref   : (tm, tn)  output tile
    acc_ref : (tm, tn)  f32 accumulator scratch
    """

    @pl.when(pl.program_id(2) == 0)
    def _init():
        acc_ref[...] = jnp.zeros_like(acc_ref)

    x = x_ref[...]
    w = w_ref[...]
    if cast_bf16:
        # Native MXU rate on v5e/v6e/v7x; accumulation stays f32.
        x = x.astype(jnp.bfloat16)
        w = w.astype(jnp.bfloat16)

    # Contract on the last dim of BOTH operands so the (N, D) weight layout is
    # consumed directly -- no wrapper-side transpose, no extra HBM traffic.
    acc_ref[...] += lax.dot_general(
        x, w, (((1,), (1,)), ((), ())), preferred_element_type=jnp.float32
    )

    @pl.when(pl.program_id(2) == pl.num_programs(2) - 1)
    def _finalize():
        o_ref[...] = acc_ref[...].astype(o_ref.dtype)


# ------------------------------- wrapper --------------------------------------
def enhance_layer_forward(
    inp,
    weight,
    step,
    *,
    tile_m: int = 256,
    tile_n: int = 512,
    tile_k: int = 512,
    use_bf16_operands: bool = False,
):
    """Pallas EnhanceLayer.forward.

    inp    : (B, S, D) float32
    weight : (D*step, D) float32   -- nn.Linear weight layout (out, in), no bias
    returns: (B, S*step, D) float32
    """
    B, S, D = inp.shape
    N = D * step
    assert weight.shape == (N, D), (weight.shape, (N, D))

    M = B * S
    x = inp.reshape(M, D)
    itemsize = jnp.dtype(inp.dtype).itemsize

    # ---- tile sizes (respect the (8, 128) BlockSpec rule) -----------------
    # M tile: multiple of 8 (sublane); ragged final tile handled by masking.
    tm = min(tile_m, _round_up(M, 8))
    # N tile: must be a multiple of 128 (lane) OR equal to the full N.
    if N <= tile_n:
        tn = N
    else:
        tn = max(128, _round_down(tile_n, 128))
    # K tile: must be a multiple of 128 OR equal to D, and must divide D so no
    # garbage columns contaminate the accumulator.
    if D <= tile_k or D % 128 != 0:
        tk = D
    else:
        tk = max(128, _round_down(min(tile_k, D), 128))
        while D % tk != 0:
            tk -= 128

    # ---- VMEM budget: device-aware clamp, shrink tiles if needed ----------
    try:
        phys_vmem = int(pltpu.get_tpu_info().vmem_capacity_bytes)
    except Exception:  # pragma: no cover - conservative fallback (v7x per-TC)
        phys_vmem = 64 << 20
    cap = int(phys_vmem * 0.75)

    def _padded(rows, cols):
        return _round_up(rows, 8) * _round_up(cols, 128)

    def _vmem_estimate(tm_, tn_, tk_):
        # double-buffered x / w / out tiles (+ f32 accumulator) + margin
        return (
            itemsize * 2 * (_padded(tm_, tk_) + _padded(tn_, tk_) + _padded(tm_, tn_))
            + 4 * _padded(tm_, tn_)
            + (2 << 20)
        )

    for _ in range(8):
        if _vmem_estimate(tm, tn, tk) <= cap:
            break
        if tn > 128 and tn % 256 == 0:
            tn //= 2
        elif tk != D and tk > 128 and tk % 256 == 0:
            tk //= 2
        elif tm > 8:
            tm = max(8, _round_down(tm // 2, 8))
        else:
            break
    vmem_bytes = min(cap, _vmem_estimate(tm, tn, tk))

    grid = (pl.cdiv(M, tm), pl.cdiv(N, tn), D // tk)

    cost = pl.CostEstimate(
        flops=2 * M * N * D,
        transcendentals=0,
        bytes_accessed=itemsize * (M * D + N * D + M * N),
    )

    kernel = functools.partial(_enhance_kernel, cast_bf16=use_bf16_operands)

    out = pl.pallas_call(
        kernel,
        out_shape=jax.ShapeDtypeStruct((M, N), inp.dtype),
        grid_spec=pltpu.PrefetchScalarGridSpec(
            num_scalar_prefetch=0,
            grid=grid,
            in_specs=[
                # activations: tiled over (M, K)
                pl.BlockSpec((tm, tk), lambda i, j, k: (i, k)),
                # weight in native (N, D) layout: tiled over (N, K)
                pl.BlockSpec((tn, tk), lambda i, j, k: (j, k)),
            ],
            out_specs=pl.BlockSpec((tm, tn), lambda i, j, k: (i, j)),
            scratch_shapes=[pltpu.VMEM((tm, tn), jnp.float32)],
        ),
        compiler_params=pltpu.CompilerParams(
            dimension_semantics=("parallel", "parallel", "arbitrary"),
            vmem_limit_bytes=int(vmem_bytes),
        ),
        cost_estimate=cost,
    )(x, weight)

    # (M, step*D) row-major == (M*step, D) row-major: free contiguous reshape.
    return out.reshape(B, S * step, D)


# ---------------------------- pure-JAX reference -------------------------------
def reference_forward(inp, weight, step):
    B, S, D = inp.shape
    out = jnp.einsum("bsd,nd->bsn", inp, weight)  # (B, S, D*step)
    return out.reshape(B, S * step, D)


# ------------------------------------ main ------------------------------------
if __name__ == "__main__":
    key = jax.random.PRNGKey(0)
    k_inp, k_w, k_inp2 = jax.random.split(key, 3)

    B, S, D, STEP = 2, 8, 32, 4
    inp = jax.random.normal(k_inp, (B, S, D), dtype=jnp.float32)
    weight = 0.02 * jax.random.normal(k_w, (D * STEP, D), dtype=jnp.float32)

    # f32 path (bit-faithful to the PyTorch module, tight tolerance).
    out = jax.block_until_ready(enhance_layer_forward(inp, weight, STEP))
    ref = reference_forward(inp, weight, STEP)
    assert out.shape == (B, S * STEP, D), out.shape
    assert jnp.allclose(out, ref, rtol=1e-5, atol=1e-5), float(
        jnp.max(jnp.abs(out - ref))
    )

    # Ragged-M path (M = 5, not a multiple of the 8-row sublane granule):
    # exercised via Pallas masking, no pad / slice round-trips.
    inp_odd = jax.random.normal(k_inp2, (1, 5, D), dtype=jnp.float32)
    out_odd = jax.block_until_ready(enhance_layer_forward(inp_odd, weight, STEP))
    ref_odd = reference_forward(inp_odd, weight, STEP)
    assert out_odd.shape == (1, 5 * STEP, D), out_odd.shape
    assert jnp.allclose(out_odd, ref_odd, rtol=1e-5, atol=1e-5), float(
        jnp.max(jnp.abs(out_odd - ref_odd))
    )

    # bf16 MXU-operand path (looser tolerance due to bf16 rounding).
    out_bf16 = jax.block_until_ready(
        enhance_layer_forward(inp, weight, STEP, use_bf16_operands=True)
    )
    assert out_bf16.shape == (B, S * STEP, D), out_bf16.shape
    assert jnp.allclose(out_bf16, ref, rtol=2e-2, atol=2e-2), float(
        jnp.max(jnp.abs(out_bf16 - ref))
    )

    print("KERNEL_OK")
</pallas_src>

<mosaic_0001>
module attributes {stable_mosaic.version = 11 : i64} {
  func.func @_enhance_kernel(%arg0: i32, %arg1: i32, %arg2: i32, %arg3: memref<16x32xf32, #tpu.memory_space<vmem>>, %arg4: memref<128x32xf32, #tpu.memory_space<vmem>>, %arg5: memref<16x128xf32, #tpu.memory_space<vmem>>, %arg6: memref<16x128xf32, #tpu.memory_space<vmem>>) attributes {dimension_semantics = [#tpu.dimension_semantics<parallel>, #tpu.dimension_semantics<parallel>, #tpu.dimension_semantics<arbitrary>], iteration_bounds = array<i64: 1, 1, 1>, scalar_prefetch = 0 : i64, scratch_operands = 1 : i64, tpu.core_type = #tpu.core_type<tc>, window_params = [{transform_indices = @transform_0, window_bounds = array<i64: 16, 32>}, {transform_indices = @transform_1, window_bounds = array<i64: 128, 32>}, {transform_indices = @transform_2, window_bounds = array<i64: 16, 128>}]} {
    %c0_i32 = arith.constant 0 : i32
    %0 = arith.cmpi eq, %arg2, %c0_i32 : i32
    %1 = arith.extui %0 : i1 to i32
    %c0_i32_0 = arith.constant 0 : i32
    %2 = arith.cmpi ne, %1, %c0_i32_0 : i32
    scf.if %2 {
      %cst_10 = arith.constant 0.000000e+00 : f32
      %12 = vector.broadcast %cst_10 : f32 to vector<16x128xf32>
      %c0_11 = arith.constant 0 : index
      %c0_12 = arith.constant 0 : index
      %13 = vector.load %arg6[%c0_11, %c0_12] : memref<16x128xf32, #tpu.memory_space<vmem>>, vector<16x128xf32>
      tpu.vector_store %arg6[%c0_11, %c0_12], %12 {strides = array<i32>} : memref<16x128xf32, #tpu.memory_space<vmem>>, vector<16x128xf32>,
    } else {
    }
    %c0 = arith.constant 0 : index
    %c0_1 = arith.constant 0 : index
    %3 = vector.load %arg3[%c0, %c0_1] : memref<16x32xf32, #tpu.memory_space<vmem>>, vector<16x32xf32>
    %c0_2 = arith.constant 0 : index
    %c0_3 = arith.constant 0 : index
    %4 = vector.load %arg4[%c0_2, %c0_3] : memref<128x32xf32, #tpu.memory_space<vmem>>, vector<128x32xf32>
    %c0_4 = arith.constant 0 : index
    %c0_5 = arith.constant 0 : index
    %5 = vector.load %arg6[%c0_4, %c0_5] : memref<16x128xf32, #tpu.memory_space<vmem>>, vector<16x128xf32>
    %cst = arith.constant dense<0.000000e+00> : vector<16x128xf32>
    %6 = tpu.matmul %3, %4, %cst {dimension_numbers = #tpu.dot_dimension_numbers<[1], [1], [0], [0], [0, 0, 1, 0], [], []>} : vector<16x32xf32>, vector<128x32xf32>, vector<16x128xf32> -> vector<16x128xf32>
    %7 = arith.addf %5, %6 : vector<16x128xf32>
    %c0_6 = arith.constant 0 : index
    %c0_7 = arith.constant 0 : index
    %8 = vector.load %arg6[%c0_6, %c0_7] : memref<16x128xf32, #tpu.memory_space<vmem>>, vector<16x128xf32>
    tpu.vector_store %arg6[%c0_6, %c0_7], %7 {strides = array<i32>} : memref<16x128xf32, #tpu.memory_space<vmem>>, vector<16x128xf32>,
    %c0_i32_8 = arith.constant 0 : i32
    %9 = arith.cmpi eq, %arg2, %c0_i32_8 : i32
    %10 = arith.extui %9 : i1 to i32
    %c0_i32_9 = arith.constant 0 : i32
    %11 = arith.cmpi ne, %10, %c0_i32_9 : i32
    scf.if %11 {
      %c0_10 = arith.constant 0 : index
      %c0_11 = arith.constant 0 : index
      %12 = vector.load %arg6[%c0_10, %c0_11] : memref<16x128xf32, #tpu.memory_space<vmem>>, vector<16x128xf32>
      %c0_12 = arith.constant 0 : index
      %c0_13 = arith.constant 0 : index
      %13 = vector.load %arg5[%c0_12, %c0_13] : memref<16x128xf32, #tpu.memory_space<vmem>>, vector<16x128xf32>
      tpu.vector_store %arg5[%c0_12, %c0_13], %12 {strides = array<i32>} : memref<16x128xf32, #tpu.memory_space<vmem>>, vector<16x128xf32>,
    } else {
    }
    return
  }
  func.func @transform_0(%arg0: i32, %arg1: i32, %arg2: i32) -> (i32, i32) {
    %c0_i32 = arith.constant 0 : i32
    return %arg0, %arg2 : i32, i32
  }
  func.func @transform_1(%arg0: i32, %arg1: i32, %arg2: i32) -> (i32, i32) {
    %c0_i32 = arith.constant 0 : i32
    return %arg1, %arg2 : i32, i32
  }
  func.func @transform_2(%arg0: i32, %arg1: i32, %arg2: i32) -> (i32, i32) {
    %c0_i32 = arith.constant 0 : i32
    return %arg0, %arg1 : i32, i32
  }
}

</mosaic_0001>

<llo_original>
// kernel: tpu_custom_call.1
$region0: #{tpu_custom_call.1}
  #allocation0 [shape = 'u32[]', space=smem, size = 0x4, offset = 0x4, fixed_abs, tag = 'smem constant byte address 0x4 - core index']
  #allocation1 [shape = 'u32[144,128]{1,0:T(1,128)}', space=vmem, size = 0x12000, scoped, tag = 'internal scratch']
  #allocation2 [shape = 'f32[16,128]{1,0:T(8,128)}', space=vmem, size = 0x2000, scoped, tag = 'scratch operand']
  %s0 = inlined_call_operand.vmem [shape: f32[16,32], index: 0, kind: input, shape index: {}]
  %s1 = inlined_call_operand.vmem [shape: f32[128,32], index: 1, kind: input, shape index: {}]
  %s2 = inlined_call_operand.hbm [shape: f32[16,128], index: 2, kind: output, shape index: {}]
  %s3 = sld [smem:[#allocation0]]
  $region26: #{tpu_custom_call.1} parent=0
    _
  %s5 = ssub.s32 1, %s3
  %s6 = scalar_select 0, %s5, %s3
  $region1: #{tpu_custom_call.1} parent=0
    #allocation3 [shape = 'u8[8192]{0}', space=vmem, size = 0x2000, scoped, tag = 'output window, operand 0, single buffered']
    #allocation4 [shape = 's32[1]{0}', space=sflag, size = 0x4, scoped, tag = 'scoped memory for tpu_custom_call.1']
    %7 = vsyncpa [#allocation4], 0
    // Predicated region
    $region2: #{tpu_custom_call.1} parent=1 // pred_check
      _
    $region3: #{tpu_custom_call.1} parent=1 // pred_check_branch
      %9 = sbr.rel (0) target = $region5
    $region4: #{tpu_custom_call.1} parent=1 // pred_region
      _
    $region5: #{tpu_custom_call.1} parent=1 // pred_fallthru
      _
    // Predicated region
    $region6: #{tpu_custom_call.1} parent=1 // pred_check
      _
    $region7: #{tpu_custom_call.1} parent=1 // pred_check_branch
      %11 = sbr.rel (0) target = $region9
    $region8: #{tpu_custom_call.1} parent=1 // pred_region
      _
    $region9: #{tpu_custom_call.1} parent=1 // pred_fallthru
      _
    %p12 = scmp.eq.s32.totalorder 0, 0
    // Predicated region
    $region10: #{tpu_custom_call.1} parent=1 // pred_check
      %p13 = pneg %p12
    $region11: #{tpu_custom_call.1} parent=1 // pred_check_branch
      %15 = sbr.rel (%p13) target = $region13
    $region12: #{tpu_custom_call.1} parent=1 // pred_region
      %16 = vst [vmem:[#allocation2] sm:$0xff] 0.0
      %17 = vst [vmem:[#allocation2 + $0x8] sm:$0xff] 0.0
    $region13: #{tpu_custom_call.1} parent=1 // pred_fallthru
      _
    %v18 = vld [vmem:[%s0] sm:$0xff]
    %v19 = vld [vmem:[%s0 + $0x8] sm:$0xff]
    %v20 = vld [vmem:[%s1] sm:$0xff]
    %v21 = vld [vmem:[%s1 + $0x8] sm:$0xff]
    %v22 = vld [vmem:[%s1 + $0x10] sm:$0xff]
    %v23 = vld [vmem:[%s1 + $0x18] sm:$0xff]
    %v24 = vld [vmem:[%s1 + $0x20] sm:$0xff]
    %v25 = vld [vmem:[%s1 + $0x28] sm:$0xff]
    %v26 = vld [vmem:[%s1 + $0x30] sm:$0xff]
    %v27 = vld [vmem:[%s1 + $0x38] sm:$0xff]
    %v28 = vld [vmem:[%s1 + $0x40] sm:$0xff]
    %v29 = vld [vmem:[%s1 + $0x48] sm:$0xff]
    %v30 = vld [vmem:[%s1 + $0x50] sm:$0xff]
    %v31 = vld [vmem:[%s1 + $0x58] sm:$0xff]
    %v32 = vld [vmem:[%s1 + $0x60] sm:$0xff]
    %v33 = vld [vmem:[%s1 + $0x68] sm:$0xff]
    %v34 = vld [vmem:[%s1 + $0x70] sm:$0xff]
    %v35 = vld [vmem:[%s1 + $0x78] sm:$0xff]
    %v36 = vld [vmem:[#allocation2] sm:$0xff]
    %v37 = vld [vmem:[#allocation2 + $0x8] sm:$0xff]
    %vm38 = vcmask 261120
    %v40 = vsel %vm38, %v18, 0
    %v43 = vsel %vm38, %v19, 0
    %v46 = vsel %vm38, %v20, 0
    %v49 = vsel %vm38, %v21, 0
    %v52 = vsel %vm38, %v22, 0
    %v55 = vsel %vm38, %v23, 0
    %v58 = vsel %vm38, %v24, 0
    %v61 = vsel %vm38, %v25, 0
    %v64 = vsel %vm38, %v26, 0
    %v67 = vsel %vm38, %v27, 0
    %v70 = vsel %vm38, %v28, 0
    %v73 = vsel %vm38, %v29, 0
    %v76 = vsel %vm38, %v30, 0
    %v79 = vsel %vm38, %v31, 0
    %v82 = vsel %vm38, %v32, 0
    %v85 = vsel %vm38, %v33, 0
    %v88 = vsel %vm38, %v34, 0
    %v91 = vsel %vm38, %v35, 0
    %93 = vmatprep.subr.mxu0 0.0
    %94 = vmatpush1.xpose.msra.mxu0 %v46
    %95 = vmatprep.subr.mxu0 0.0
    %96 = vmatpush1.xpose.msra.mxu0 %v49
    %97 = vmatprep.subr.mxu0 0.0
    %98 = vmatpush1.xpose.msra.mxu0 %v52
    %99 = vmatprep.subr.mxu0 0.0
    %100 = vmatpush1.xpose.msra.mxu0 %v55
    %101 = vmatprep.subr.mxu0 0.0
    %102 = vmatpush1.xpose.msra.mxu0 %v58
    %103 = vmatprep.subr.mxu0 0.0
    %104 = vmatpush1.xpose.msra.mxu0 %v61
    %105 = vmatprep.subr.mxu0 0.0
    %106 = vmatpush1.xpose.msra.mxu0 %v64
    %107 = vmatprep.subr.mxu0 0.0
    %108 = vmatpush1.xpose.msra.mxu0 %v67
    %109 = vmatprep.subr.mxu0 0.0
    %110 = vmatpush1.xpose.msra.mxu0 %v70
    %111 = vmatprep.subr.mxu0 0.0
    %112 = vmatpush1.xpose.msra.mxu0 %v73
    %113 = vmatprep.subr.mxu0 0.0
    %114 = vmatpush1.xpose.msra.mxu0 %v76
    %115 = vmatprep.subr.mxu0 0.0
    %116 = vmatpush1.xpose.msra.mxu0 %v79
    %117 = vmatprep.subr.mxu0 0.0
    %118 = vmatpush1.xpose.msra.mxu0 %v82
    %119 = vmatprep.subr.mxu0 0.0
    %120 = vmatpush1.xpose.msra.mxu0 %v85
    %121 = vmatprep.subr.mxu0 0.0
    %122 = vmatpush1.xpose.msra.mxu0 %v88
    %123 = vmatprep.subr.mxu0 0.0
    %124 = vmatpush1.xpose.msra.mxu0 %v91
    %125 = vmatprep.subr.mxu0 0.0
    %126 = vmatpush1.xpose.msra.mxu0 0.0
    %127 = vmatprep.subr.mxu0 0.0
    %128 = vmatpush1.xpose.msra.mxu0 0.0
    %129 = vmatprep.subr.mxu0 0.0
    %130 = vmatpush1.xpose.msra.mxu0 0.0
    %131 = vmatprep.subr.mxu0 0.0
    %132 = vmatpush1.xpose.msra.mxu0 0.0
    %133 = vmatprep.subr.mxu0 0.0
    %134 = vmatpush1.xpose.msra.mxu0 0.0
    %135 = vmatprep.subr.mxu0 0.0
    %136 = vmatpush1.xpose.msra.mxu0 0.0
    %137 = vmatprep.subr.mxu0 0.0
    %138 = vmatpush1.xpose.msra.mxu0 0.0
    %139 = vmatprep.subr.mxu0 0.0
    %140 = vmatpush1.xpose.msra.mxu0 0.0
    %141 = vmatprep.subr.mxu0 0.0
    %142 = vmatpush1.xpose.msra.mxu0 0.0
    %143 = vmatprep.subr.mxu0 0.0
    %144 = vmatpush1.xpose.msra.mxu0 0.0
    %145 = vmatprep.subr.mxu0 0.0
    %146 = vmatpush1.xpose.msra.mxu0 0.0
    %147 = vmatprep.subr.mxu0 0.0
    %148 = vmatpush1.xpose.msra.mxu0 0.0
    %149 = vmatprep.subr.mxu0 0.0
    %150 = vmatpush1.xpose.msra.mxu0 0.0
    %151 = vmatprep.subr.mxu0 0.0
    %152 = vmatpush1.xpose.msra.mxu0 0.0
    %153 = vmatprep.subr.mxu0 0.0
    %154 = vmatpush1.xpose.msra.mxu0 0.0
    %155 = vmatprep.subr.mxu0 0.0
    %156 = vmatpush1.xpose.msra.mxu0 0.0
    %157 = vmatprep.mubr.f32.mxu0 0.0
    %158 = vmatmul.mubr.f32.gmra.mrb[0].mxu0 %v40
    %v159 = vpop.f32.mrb[0].mxu0
    %v160 = vadd.f32 0.0, %v159
    %v161 = vpop.f32.mrb[0].mxu0
    %162 = vmatprep.mubr.f32.mxu0 0.0
    %163 = vmatmul.mubr.f32.gmra.mrb[0].mxu0 %v43
    %v164 = vpop.f32.mrb[0].mxu0
    %v165 = vadd.f32 0.0, %v164
    %v166 = vpop.f32.mrb[0].mxu0
    %167 = vdwg.mxu0
    %v168 = vadd.f32 %v36, %v160
    %v169 = vadd.f32 %v37, %v165
    %170 = vst [vmem:[#allocation2] sm:$0xff] %v168
    %171 = vst [vmem:[#allocation2 + $0x8] sm:$0xff] %v169
    // Predicated region
    $region14: #{tpu_custom_call.1} parent=1 // pred_check
      %p172 = pneg %p12
    $region15: #{tpu_custom_call.1} parent=1 // pred_check_branch
      %174 = sbr.rel (%p172) target = $region17
    $region16: #{tpu_custom_call.1} parent=1 // pred_region
      %v175 = vld [vmem:[#allocation2] sm:$0xff]
      %v176 = vld [vmem:[#allocation2 + $0x8] sm:$0xff]
      %177 = vst [vmem:[#allocation3] sm:$0xff] %v175
      %178 = vst [vmem:[#allocation3 + $0x8] sm:$0xff] %v176
    $region17: #{tpu_custom_call.1} parent=1 // pred_fallthru
      _
    // Predicated region
    $region18: #{tpu_custom_call.1} parent=1 // pred_check
      _
    $region19: #{tpu_custom_call.1} parent=1 // pred_check_branch
      %180 = sbr.rel (0) target = $region21
    $region20: #{tpu_custom_call.1} parent=1 // pred_region
      %s182 = ssub.s32 256, 256
      %183 = vsyncadd [#allocation4], %s182
      %s184 = sshll.u32 [#allocation3], 4
      %s185 = int_to_ptr.vmem [resolvable:$true] %s184
      %190 = dma.vmem_to_hbm [thread:$0]  %s185, 256, %s2, [#allocation4], 128, 128, 8
    $region21: #{tpu_custom_call.1} parent=1 // pred_fallthru
      _
    // Predicated region
    $region22: #{tpu_custom_call.1} parent=1 // pred_check
      _
    $region23: #{tpu_custom_call.1} parent=1 // pred_check_branch
      %192 = sbr.rel (0) target = $region25
    $region24: #{tpu_custom_call.1} parent=1 // pred_region
      %193 = dma.done [#allocation4], 256
    $region25: #{tpu_custom_call.1} parent=1 // pred_fallthru
      _
    %194 = vsyncpa [#allocation4], 1

</llo_original>
